<compile_context>
chip_gen: v6e
topology: v6e:2x2x1
jax: 0.10.0
libtpu: 0.0.40
codegen_flags: <defaults>
</compile_context>

<pallas_src>
import functools

import jax
import jax.numpy as jnp
from jax.experimental import pallas as pl
from jax.experimental.pallas import tpu as pltpu

LANE = 128   # lane width (last dim tiling)
SUB = 8      # sublane width (second-to-last dim tiling)


def _round_up(n, m):
    return ((n + m - 1) // m) * m


def _pad2d(a, rows, cols):
    r, c = a.shape
    return jnp.pad(a, ((0, rows - r), (0, cols - c)))


# ---------------------------------------------------------------------------
# Kernel: fused fc1 -> relu -> fc3 -> relu -> fc2 -> relu on one batch tile.
# bf16 operands feed the MXU; accumulation, bias-add and ReLU are f32.
# ---------------------------------------------------------------------------
def _qnet_kernel(x_ref, w1_ref, b1_ref, w3_ref, b3_ref, w2_ref, b2_ref, o_ref):
    h1 = jnp.dot(x_ref[...], w1_ref[...], preferred_element_type=jnp.float32)
    h1 = jnp.maximum(h1 + b1_ref[...], 0.0)

    h2 = jnp.dot(h1.astype(w3_ref.dtype), w3_ref[...],
                 preferred_element_type=jnp.float32)
    h2 = jnp.maximum(h2 + b3_ref[...], 0.0)

    q = jnp.dot(h2.astype(w2_ref.dtype), w2_ref[...],
                preferred_element_type=jnp.float32)
    q = jnp.maximum(q + b2_ref[...], 0.0)          # reference applies ReLU to Q too
    o_ref[...] = q.astype(o_ref.dtype)


# ---------------------------------------------------------------------------
# One-time parameter preparation (hoisted out of the forward path).
# ---------------------------------------------------------------------------
def prepare_qnet_params(params, dtype=jnp.bfloat16):
    """Transpose + zero-pad once. Weights in `dtype` (bf16 default = native MXU
    operand on v5e/v6e/v7x; halves resident VMEM and DMA bytes); biases stay f32
    so bias-add/ReLU run in f32. Zero padding is exact under ReLU. Din is NOT
    padded (the MXU pads K internally), keeping x DMAs narrow for tiny in_dim."""
    in_dim = params["w1"].shape[1]
    h_dim = params["w1"].shape[0]
    out_dim = params["w2"].shape[0]

    h_p = _round_up(h_dim, LANE)
    dout_p = _round_up(out_dim, LANE)

    prep = {
        "w1": _pad2d(params["w1"].T.astype(dtype), in_dim, h_p),     # (Din, H_p)
        "b1": _pad2d(params["b1"][None, :].astype(jnp.float32), 1, h_p),
        "w3": _pad2d(params["w3"].T.astype(dtype), h_p, h_p),        # (H_p, H_p)
        "b3": _pad2d(params["b3"][None, :].astype(jnp.float32), 1, h_p),
        "w2": _pad2d(params["w2"].T.astype(dtype), h_p, dout_p),     # (H_p, Dout_p)
        "b2": _pad2d(params["b2"][None, :].astype(jnp.float32), 1, dout_p),
    }
    dims = {"in_dim": in_dim, "h_dim": h_dim, "out_dim": out_dim,
            "h_p": h_p, "dout_p": dout_p}
    return prep, dims


# ---------------------------------------------------------------------------
# Batch-tile selection: big tiles to amortize per-step overhead, but >=2 grid
# steps when the batch allows it so both v7x TensorCores get work.
# ---------------------------------------------------------------------------
def _choose_tiling(batch, h_p):
    cap = 512 if h_p <= 512 else 256
    tile = min(cap, _round_up(max(batch, 1), SUB))
    if tile >= 2 * SUB and _round_up(batch, tile) // tile < 2:
        tile = _round_up((batch + 1) // 2, SUB)     # split into 2 parallel tiles
    bp = _round_up(batch, tile)
    return tile, bp


# ---------------------------------------------------------------------------
# Jitted forward on pre-padded inputs: grid over batch tiles, weights resident
# (constant index_map, single-buffered).
# ---------------------------------------------------------------------------
@functools.partial(jax.jit, static_argnames=("tile_b",))
def _qnet_forward_padded(xp, w1, b1, w3, b3, w2, b2, *, tile_b):
    bp, din = xp.shape
    h_p = w1.shape[1]
    dout_p = w2.shape[1]
    grid = (bp // tile_b,)

    w_isize = jnp.dtype(w1.dtype).itemsize
    x_isize = jnp.dtype(xp.dtype).itemsize
    weight_elems = din * h_p + h_p * h_p + h_p * dout_p
    weight_bytes = weight_elems * w_isize                    # single-buffered weights
    bias_bytes = (2 * h_p + dout_p) * 4                      # f32 biases
    xo_tile_bytes = 2 * tile_b * (din * x_isize + dout_p * 4)  # double-buffered x/o
    live_bytes = 2 * tile_b * h_p * 4                        # f32 intermediates
    vmem_limit = int((weight_bytes + bias_bytes + xo_tile_bytes + live_bytes) * 1.5)
    vmem_limit = min(max(vmem_limit + (2 << 20), 32 << 20), 64 << 20)

    cost = pl.CostEstimate(
        flops=2 * bp * weight_elems,
        transcendentals=0,
        bytes_accessed=weight_bytes + bias_bytes
        + bp * din * x_isize + bp * dout_p * 4)

    resident = dict(pipeline_mode=pl.Buffered(1))   # constant block -> one buffer

    return pl.pallas_call(
        _qnet_kernel,
        out_shape=jax.ShapeDtypeStruct((bp, dout_p), jnp.float32),
        grid=grid,
        in_specs=[
            pl.BlockSpec((tile_b, din), lambda i: (i, 0)),              # x tile
            pl.BlockSpec((din, h_p),   lambda i: (0, 0), **resident),   # w1 (resident)
            pl.BlockSpec((1, h_p),     lambda i: (0, 0), **resident),   # b1
            pl.BlockSpec((h_p, h_p),   lambda i: (0, 0), **resident),   # w3
            pl.BlockSpec((1, h_p),     lambda i: (0, 0), **resident),   # b3
            pl.BlockSpec((h_p, dout_p), lambda i: (0, 0), **resident),  # w2
            pl.BlockSpec((1, dout_p),  lambda i: (0, 0), **resident),   # b2
        ],
        out_specs=pl.BlockSpec((tile_b, dout_p), lambda i: (i, 0)),
        compiler_params=pltpu.CompilerParams(
            dimension_semantics=("parallel",),       # shard batch tiles across TCs
            vmem_limit_bytes=vmem_limit),
        cost_estimate=cost,
    )(xp, w1, b1, w3, b3, w2, b2)
    # TODO(synk): for very large h_dim where single-buffered weights exceed ~48 MiB
    # (h_dim >~ 4k bf16), add a K-tiling grid axis over h_p with an f32 VMEM
    # accumulator (batch "parallel", k "arbitrary" last, @pl.when init/finalize)
    # instead of keeping all three weight matrices resident (v7x 64 MiB budget).


def qnet_forward(x, prep, dims):
    """Returns the padded (Bp, Dout_p) Q matrix; valid entries are [:B, :out_dim].
    NOTE: padded batch rows are NOT zero (they equal relu(bias chain)) — every
    consumer must slice [:B, :out_dim]."""
    B = x.shape[0]
    tile_b, bp = _choose_tiling(B, dims["h_p"])
    xp = jnp.pad(x.astype(prep["w1"].dtype), ((0, bp - B), (0, 0)))  # batch pad only
    return _qnet_forward_padded(xp, prep["w1"], prep["b1"],
                                prep["w3"], prep["b3"],
                                prep["w2"], prep["b2"], tile_b=tile_b)


# ---------------------------------------------------------------------------
# Init + pure-JAX reference (mirrors the PyTorch module).
# ---------------------------------------------------------------------------
def init_qnet_params(key, in_dim, out_dim):
    """torch.nn.Linear-style init: uniform(+/- 1/sqrt(fan_in))."""
    h_dim = in_dim  # Qnet sets self.h_dim = in_dim
    ks = jax.random.split(key, 6)

    def lin(kw, kb, fan_in, fan_out):
        bound = 1.0 / jnp.sqrt(jnp.float32(fan_in))
        w = jax.random.uniform(kw, (fan_out, fan_in), jnp.float32, -bound, bound)
        b = jax.random.uniform(kb, (fan_out,), jnp.float32, -bound, bound)
        return w, b

    w1, b1 = lin(ks[0], ks[1], in_dim, h_dim)
    w3, b3 = lin(ks[2], ks[3], h_dim, h_dim)
    w2, b2 = lin(ks[4], ks[5], h_dim, out_dim)
    return {"w1": w1, "b1": b1, "w3": w3, "b3": b3, "w2": w2, "b2": b2}


def qnet_reference(x, p):
    h1 = jnp.maximum(x @ p["w1"].T + p["b1"], 0.0)
    h2 = jnp.maximum(h1 @ p["w3"].T + p["b3"], 0.0)
    return jnp.maximum(h2 @ p["w2"].T + p["b2"], 0.0)


if __name__ == "__main__":
    key = jax.random.PRNGKey(0)
    k_param, k_x, k_x2 = jax.random.split(key, 3)

    in_dim, out_dim = 4, 2          # CartPole: state dim 4, 2 actions
    params = init_qnet_params(k_param, in_dim, out_dim)

    # One-time weight prep (transpose + pad + bf16 cast) — off the per-call path.
    prep, dims = prepare_qnet_params(params)

    # Small acting batch (single grid step).
    batch = 8
    x = jax.random.normal(k_x, (batch, in_dim), jnp.float32)
    q_padded = jax.block_until_ready(qnet_forward(x, prep, dims))
    q = q_padded[:batch, :out_dim]
    q_ref = qnet_reference(x, params)
    assert q.shape == (batch, out_dim)
    # bf16 MXU operands: loosen tolerance (accumulation stays f32).
    assert jnp.allclose(q, q_ref, atol=2e-2, rtol=2e-2), (q, q_ref)

    # Replay-buffer-sized batch (>=2 parallel batch tiles for v7x dual-TC).
    batch2 = 40
    xb = jax.random.normal(k_x2, (batch2, in_dim), jnp.float32)
    qb = jax.block_until_ready(qnet_forward(xb, prep, dims))[:batch2, :out_dim]
    qb_ref = qnet_reference(xb, params)
    assert qb.shape == (batch2, out_dim)
    assert jnp.allclose(qb, qb_ref, atol=2e-2, rtol=2e-2), (qb, qb_ref)

    print("KERNEL_OK")
</pallas_src>

<mosaic_0001>
module attributes {stable_mosaic.version = 11 : i64} {
  func.func @_qnet_kernel(%arg0: i32, %arg1: memref<8x4xbf16, #tpu.memory_space<vmem>>, %arg2: memref<4x128xbf16, #tpu.memory_space<vmem>>, %arg3: memref<1x128xf32, #tpu.memory_space<vmem>>, %arg4: memref<128x128xbf16, #tpu.memory_space<vmem>>, %arg5: memref<1x128xf32, #tpu.memory_space<vmem>>, %arg6: memref<128x128xbf16, #tpu.memory_space<vmem>>, %arg7: memref<1x128xf32, #tpu.memory_space<vmem>>, %arg8: memref<8x128xf32, #tpu.memory_space<vmem>>) attributes {dimension_semantics = [#tpu.dimension_semantics<parallel>], iteration_bounds = array<i64: 1>, scalar_prefetch = 0 : i64, scratch_operands = 0 : i64, tpu.core_type = #tpu.core_type<tc>, window_params = [{transform_indices = @transform_0, window_bounds = array<i64: 8, 4>}, {pipeline_mode = #tpu.pipeline_mode<synchronous>, transform_indices = @transform_1, window_bounds = array<i64: 4, 128>}, {pipeline_mode = #tpu.pipeline_mode<synchronous>, transform_indices = @transform_2, window_bounds = array<i64: 1, 128>}, {pipeline_mode = #tpu.pipeline_mode<synchronous>, transform_indices = @transform_3, window_bounds = array<i64: 128, 128>}, {pipeline_mode = #tpu.pipeline_mode<synchronous>, transform_indices = @transform_4, window_bounds = array<i64: 1, 128>}, {pipeline_mode = #tpu.pipeline_mode<synchronous>, transform_indices = @transform_5, window_bounds = array<i64: 128, 128>}, {pipeline_mode = #tpu.pipeline_mode<synchronous>, transform_indices = @transform_6, window_bounds = array<i64: 1, 128>}, {transform_indices = @transform_7, window_bounds = array<i64: 8, 128>}]} {
    %c0 = arith.constant 0 : index
    %c0_0 = arith.constant 0 : index
    %0 = vector.load %arg1[%c0, %c0_0] : memref<8x4xbf16, #tpu.memory_space<vmem>>, vector<8x4xbf16>
    %c0_1 = arith.constant 0 : index
    %c0_2 = arith.constant 0 : index
    %1 = vector.load %arg2[%c0_1, %c0_2] : memref<4x128xbf16, #tpu.memory_space<vmem>>, vector<4x128xbf16>
    %cst = arith.constant dense<0.000000e+00> : vector<8x128xf32>
    %2 = tpu.matmul %0, %1, %cst {dimension_numbers = #tpu.dot_dimension_numbers<[1], [0], [0], [1], [0, 0, 1, 1], [], []>} : vector<8x4xbf16>, vector<4x128xbf16>, vector<8x128xf32> -> vector<8x128xf32>
    %c0_3 = arith.constant 0 : index
    %c0_4 = arith.constant 0 : index
    %3 = vector.load %arg3[%c0_3, %c0_4] : memref<1x128xf32, #tpu.memory_space<vmem>>, vector<1x128xf32>
    %4 = vector.broadcast %3 : vector<1x128xf32> to vector<8x128xf32>
    %5 = arith.addf %2, %4 : vector<8x128xf32>
    %cst_5 = arith.constant 0.000000e+00 : f32
    %6 = vector.broadcast %cst_5 : f32 to vector<8x128xf32>
    %7 = arith.maximumf %5, %6 : vector<8x128xf32>
    %8 = arith.truncf %7 : vector<8x128xf32> to vector<8x128xbf16>
    %c0_6 = arith.constant 0 : index
    %c0_7 = arith.constant 0 : index
    %9 = vector.load %arg4[%c0_6, %c0_7] : memref<128x128xbf16, #tpu.memory_space<vmem>>, vector<128x128xbf16>
    %cst_8 = arith.constant dense<0.000000e+00> : vector<8x128xf32>
    %10 = tpu.matmul %8, %9, %cst_8 {dimension_numbers = #tpu.dot_dimension_numbers<[1], [0], [0], [1], [0, 0, 1, 1], [], []>} : vector<8x128xbf16>, vector<128x128xbf16>, vector<8x128xf32> -> vector<8x128xf32>
    %c0_9 = arith.constant 0 : index
    %c0_10 = arith.constant 0 : index
    %11 = vector.load %arg5[%c0_9, %c0_10] : memref<1x128xf32, #tpu.memory_space<vmem>>, vector<1x128xf32>
    %12 = vector.broadcast %11 : vector<1x128xf32> to vector<8x128xf32>
    %13 = arith.addf %10, %12 : vector<8x128xf32>
    %cst_11 = arith.constant 0.000000e+00 : f32
    %14 = vector.broadcast %cst_11 : f32 to vector<8x128xf32>
    %15 = arith.maximumf %13, %14 : vector<8x128xf32>
    %16 = arith.truncf %15 : vector<8x128xf32> to vector<8x128xbf16>
    %c0_12 = arith.constant 0 : index
    %c0_13 = arith.constant 0 : index
    %17 = vector.load %arg6[%c0_12, %c0_13] : memref<128x128xbf16, #tpu.memory_space<vmem>>, vector<128x128xbf16>
    %cst_14 = arith.constant dense<0.000000e+00> : vector<8x128xf32>
    %18 = tpu.matmul %16, %17, %cst_14 {dimension_numbers = #tpu.dot_dimension_numbers<[1], [0], [0], [1], [0, 0, 1, 1], [], []>} : vector<8x128xbf16>, vector<128x128xbf16>, vector<8x128xf32> -> vector<8x128xf32>
    %c0_15 = arith.constant 0 : index
    %c0_16 = arith.constant 0 : index
    %19 = vector.load %arg7[%c0_15, %c0_16] : memref<1x128xf32, #tpu.memory_space<vmem>>, vector<1x128xf32>
    %20 = vector.broadcast %19 : vector<1x128xf32> to vector<8x128xf32>
    %21 = arith.addf %18, %20 : vector<8x128xf32>
    %cst_17 = arith.constant 0.000000e+00 : f32
    %22 = vector.broadcast %cst_17 : f32 to vector<8x128xf32>
    %23 = arith.maximumf %21, %22 : vector<8x128xf32>
    %c0_18 = arith.constant 0 : index
    %c0_19 = arith.constant 0 : index
    %24 = vector.load %arg8[%c0_18, %c0_19] : memref<8x128xf32, #tpu.memory_space<vmem>>, vector<8x128xf32>
    tpu.vector_store %arg8[%c0_18, %c0_19], %23 {strides = array<i32>} : memref<8x128xf32, #tpu.memory_space<vmem>>, vector<8x128xf32>,
    return
  }
  func.func @transform_0(%arg0: i32) -> (i32, i32) {
    %c0_i32 = arith.constant 0 : i32
    %c0_i32_0 = arith.constant 0 : i32
    return %arg0, %c0_i32 : i32, i32
  }
  func.func @transform_1(%arg0: i32) -> (i32, i32) {
    %c0_i32 = arith.constant 0 : i32
    %c0_i32_0 = arith.constant 0 : i32
    %c0_i32_1 = arith.constant 0 : i32
    return %c0_i32, %c0_i32_0 : i32, i32
  }
  func.func @transform_2(%arg0: i32) -> (i32, i32) {
    %c0_i32 = arith.constant 0 : i32
    %c0_i32_0 = arith.constant 0 : i32
    %c0_i32_1 = arith.constant 0 : i32
    return %c0_i32, %c0_i32_0 : i32, i32
  }
  func.func @transform_3(%arg0: i32) -> (i32, i32) {
    %c0_i32 = arith.constant 0 : i32
    %c0_i32_0 = arith.constant 0 : i32
    %c0_i32_1 = arith.constant 0 : i32
    return %c0_i32, %c0_i32_0 : i32, i32
  }
  func.func @transform_4(%arg0: i32) -> (i32, i32) {
    %c0_i32 = arith.constant 0 : i32
    %c0_i32_0 = arith.constant 0 : i32
    %c0_i32_1 = arith.constant 0 : i32
    return %c0_i32, %c0_i32_0 : i32, i32
  }
  func.func @transform_5(%arg0: i32) -> (i32, i32) {
    %c0_i32 = arith.constant 0 : i32
    %c0_i32_0 = arith.constant 0 : i32
    %c0_i32_1 = arith.constant 0 : i32
    return %c0_i32, %c0_i32_0 : i32, i32
  }
  func.func @transform_6(%arg0: i32) -> (i32, i32) {
    %c0_i32 = arith.constant 0 : i32
    %c0_i32_0 = arith.constant 0 : i32
    %c0_i32_1 = arith.constant 0 : i32
    return %c0_i32, %c0_i32_0 : i32, i32
  }
  func.func @transform_7(%arg0: i32) -> (i32, i32) {
    %c0_i32 = arith.constant 0 : i32
    %c0_i32_0 = arith.constant 0 : i32
    return %arg0, %c0_i32 : i32, i32
  }
}

</mosaic_0001>

<llo_original>
// kernel: _qnet_forward_padded.1
$region0: #{_qnet_forward_padded.1}
  #allocation0 [shape = 'u32[]', space=smem, size = 0x4, offset = 0x4, fixed_abs, tag = 'smem constant byte address 0x4 - core index']
  #allocation1 [shape = 'u32[144,128]{1,0:T(1,128)}', space=vmem, size = 0x12000, scoped, tag = 'internal scratch']
  %s0 = inlined_call_operand.vmem [shape: bf16[8,4], index: 0, kind: input, shape index: {}]
  %s1 = inlined_call_operand.vmem [shape: bf16[4,128], index: 1, kind: input, shape index: {}]
  %s2 = inlined_call_operand.vmem [shape: f32[1,128], index: 2, kind: input, shape index: {}]
  %s3 = inlined_call_operand.hbm [shape: bf16[128,128], index: 3, kind: input, shape index: {}]
  %s4 = inlined_call_operand.vmem [shape: f32[1,128], index: 4, kind: input, shape index: {}]
  %s5 = inlined_call_operand.hbm [shape: bf16[128,128], index: 5, kind: input, shape index: {}]
  %s6 = inlined_call_operand.vmem [shape: f32[1,128], index: 6, kind: input, shape index: {}]
  %s7 = inlined_call_operand.hbm [shape: f32[8,128], index: 7, kind: output, shape index: {}]
  %s8 = sld [smem:[#allocation0]]
  $region46: #{_qnet_forward_padded.1} parent=0
    _
  %s10 = ssub.s32 1, %s8
  %s11 = scalar_select 0, %s10, %s8
  $region1: #{_qnet_forward_padded.1} parent=0
    #allocation2 [shape = 'u8[32768]{0}', space=vmem, size = 0x8000, scoped, tag = 'input window, operand 3, single buffered']
    #allocation3 [shape = 's32[1]{0}', space=sflag, size = 0x4, scoped, tag = 'scoped memory for _qnet_forward_padded.1']
    #allocation4 [shape = 's32[1]{0}', space=sflag, size = 0x4, scoped, tag = 'scoped memory for _qnet_forward_padded.1']
    #allocation5 [shape = 'u8[32768]{0}', space=vmem, size = 0x8000, scoped, tag = 'input window, operand 5, single buffered']
    #allocation6 [shape = 's32[1]{0}', space=sflag, size = 0x4, scoped, tag = 'scoped memory for _qnet_forward_padded.1']
    #allocation7 [shape = 'u8[4096]{0}', space=vmem, size = 0x1000, scoped, tag = 'output window, operand 0, single buffered']
    %12 = vsyncpa [#allocation3], 0
    %13 = vsyncpa [#allocation6], 0
    %14 = vsyncpa [#allocation4], 0
    // Predicated region
    $region2: #{_qnet_forward_padded.1} parent=1 // pred_check
      _
    $region3: #{_qnet_forward_padded.1} parent=1 // pred_check_branch
      %16 = sbr.rel (0) target = $region5
    $region4: #{_qnet_forward_padded.1} parent=1 // pred_region
      _
    $region5: #{_qnet_forward_padded.1} parent=1 // pred_fallthru
      _
    // Predicated region
    $region6: #{_qnet_forward_padded.1} parent=1 // pred_check
      _
    $region7: #{_qnet_forward_padded.1} parent=1 // pred_check_branch
      %18 = sbr.rel (0) target = $region9
    $region8: #{_qnet_forward_padded.1} parent=1 // pred_region
      _
    $region9: #{_qnet_forward_padded.1} parent=1 // pred_fallthru
      _
    // Predicated region
    $region10: #{_qnet_forward_padded.1} parent=1 // pred_check
      _
    $region11: #{_qnet_forward_padded.1} parent=1 // pred_check_branch
      %20 = sbr.rel (0) target = $region13
    $region12: #{_qnet_forward_padded.1} parent=1 // pred_region
      _
    $region13: #{_qnet_forward_padded.1} parent=1 // pred_fallthru
      _
    // Predicated region
    $region14: #{_qnet_forward_padded.1} parent=1 // pred_check
      _
    $region15: #{_qnet_forward_padded.1} parent=1 // pred_check_branch
      %22 = sbr.rel (0) target = $region17
    $region16: #{_qnet_forward_padded.1} parent=1 // pred_region
      %s24 = ssub.s32 1024, 1024
      %25 = vsyncadd [#allocation3], %s24
      %s26 = sshll.u32 [#allocation2], 4
      %s27 = int_to_ptr.vmem [resolvable:$true] %s26
      %32 = dma.hbm_to_vmem [thread:$0]  %s3, 1024, %s27, [#allocation3], 64, 64, 4
    $region17: #{_qnet_forward_padded.1} parent=1 // pred_fallthru
      _
    // Predicated region
    $region18: #{_qnet_forward_padded.1} parent=1 // pred_check
      _
    $region19: #{_qnet_forward_padded.1} parent=1 // pred_check_branch
      %34 = sbr.rel (0) target = $region21
    $region20: #{_qnet_forward_padded.1} parent=1 // pred_region
      _
    $region21: #{_qnet_forward_padded.1} parent=1 // pred_fallthru
      _
    // Predicated region
    $region22: #{_qnet_forward_padded.1} parent=1 // pred_check
      _
    $region23: #{_qnet_forward_padded.1} parent=1 // pred_check_branch
      %36 = sbr.rel (0) target = $region25
    $region24: #{_qnet_forward_padded.1} parent=1 // pred_region
      %s38 = ssub.s32 1024, 1024
      %39 = vsyncadd [#allocation6], %s38
      %s40 = sshll.u32 [#allocation5], 4
      %s41 = int_to_ptr.vmem [resolvable:$true] %s40
      %46 = dma.hbm_to_vmem [thread:$0]  %s5, 1024, %s41, [#allocation6], 64, 64, 4
    $region25: #{_qnet_forward_padded.1} parent=1 // pred_fallthru
      _
    // Predicated region
    $region26: #{_qnet_forward_padded.1} parent=1 // pred_check
      _
    $region27: #{_qnet_forward_padded.1} parent=1 // pred_check_branch
      %48 = sbr.rel (0) target = $region29
    $region28: #{_qnet_forward_padded.1} parent=1 // pred_region
      _
    $region29: #{_qnet_forward_padded.1} parent=1 // pred_fallthru
      _
    // Predicated region
    $region30: #{_qnet_forward_padded.1} parent=1 // pred_check
      _
    $region31: #{_qnet_forward_padded.1} parent=1 // pred_check_branch
      %50 = sbr.rel (0) target = $region33
    $region32: #{_qnet_forward_padded.1} parent=1 // pred_region
      %51 = dma.done [#allocation3], 1024
    $region33: #{_qnet_forward_padded.1} parent=1 // pred_fallthru
      _
    // Predicated region
    $region34: #{_qnet_forward_padded.1} parent=1 // pred_check
      _
    $region35: #{_qnet_forward_padded.1} parent=1 // pred_check_branch
      %53 = sbr.rel (0) target = $region37
    $region36: #{_qnet_forward_padded.1} parent=1 // pred_region
      %54 = dma.done [#allocation6], 1024
    $region37: #{_qnet_forward_padded.1} parent=1 // pred_fallthru
      _
    %v56 = vld [vmem:[%s0] sm:$0xf]
    %v57 = vld [vmem:[%s1] sm:$0x3]
    %v58 = vld [vmem:[%s2] sm:$0x1]
    %v60 = vlaneseq
    %v61 = vshrl.u32 %v60, 7
    %v62 = vsub.s32 0, %v61
    %v63 = vrot.slane %v58, %v62
    %vm65 = vcmask 31744
    %v67 = vsel %vm65, %v56, 0
    %vm69 = vcmask 1041408
    %v71 = vsel %vm69, %v57, 0
    %73 = vmatprep.subr.bf16.mxu0 0
    %74 = vmatpush1.bf16.msra.mxu0 0
    %75 = vmatprep.subr.bf16.mxu0 0
    %76 = vmatpush1.bf16.msra.mxu0 0
    %77 = vmatprep.subr.bf16.mxu0 0
    %78 = vmatpush1.bf16.msra.mxu0 0
    %79 = vmatprep.subr.bf16.mxu0 0
    %80 = vmatpush1.bf16.msra.mxu0 0
    %81 = vmatprep.subr.bf16.mxu0 0
    %82 = vmatpush1.bf16.msra.mxu0 0
    %83 = vmatprep.subr.bf16.mxu0 0
    %84 = vmatpush1.bf16.msra.mxu0 0
    %85 = vmatprep.subr.bf16.mxu0 0
    %86 = vmatpush1.bf16.msra.mxu0 0
    %87 = vmatprep.subr.bf16.mxu0 0
    %88 = vmatpush1.bf16.msra.mxu0 %v71
    %89 = vmatprep.subr.bf16.mxu0 0
    %90 = vmatpush2.bf16.msra.mxu0 0
    %91 = vmatprep.subr.bf16.mxu0 0
    %92 = vmatpush2.bf16.msra.mxu0 0
    %93 = vmatprep.subr.bf16.mxu0 0
    %94 = vmatpush2.bf16.msra.mxu0 0
    %95 = vmatprep.subr.bf16.mxu0 0
    %96 = vmatpush2.bf16.msra.mxu0 0
    %97 = vmatprep.subr.bf16.mxu0 0
    %98 = vmatpush2.bf16.msra.mxu0 0
    %99 = vmatprep.subr.bf16.mxu0 0
    %100 = vmatpush2.bf16.msra.mxu0 0
    %101 = vmatprep.subr.bf16.mxu0 0
    %102 = vmatpush2.bf16.msra.mxu0 0
    %103 = vmatprep.subr.bf16.mxu0 0
    %104 = vmatpush2.bf16.msra.mxu0 0
    %105 = vmatprep.mubr.bf16.mxu0 0
    %106 = vmatmul.mubr.bf16.gmra.mxu0 %v67
    %v107 = vpop.f32.mrf.mxu0
    %v108 = vadd.f32 %v63, %v107
    %v109 = vpop.f32.mrf.mxu0
    %v110 = vpop.f32.mrf.mxu0
    %v111 = vpop.f32.mrf.mxu0
    %112 = vdwg.mxu0
    %v113 = vmax.f32 %v108, 0.0
    %v114 = vpack.c.bf16 %v113, %v113
    %v115 = vld [vmem:[#allocation2] sm:$0xf]
    %v116 = vld [vmem:[#allocation2 + $0x4] sm:$0xf]
    %v117 = vld [vmem:[#allocation2 + $0x8] sm:$0xf]
    %v118 = vld [vmem:[#allocation2 + $0xc] sm:$0xf]
    %v119 = vld [vmem:[#allocation2 + $0x10] sm:$0xf]
    %v120 = vld [vmem:[#allocation2 + $0x14] sm:$0xf]
    %v121 = vld [vmem:[#allocation2 + $0x18] sm:$0xf]
    %v122 = vld [vmem:[#allocation2 + $0x1c] sm:$0xf]
    %v123 = vld [vmem:[#allocation2 + $0x20] sm:$0xf]
    %v124 = vld [vmem:[#allocation2 + $0x24] sm:$0xf]
    %v125 = vld [vmem:[#allocation2 + $0x28] sm:$0xf]
    %v126 = vld [vmem:[#allocation2 + $0x2c] sm:$0xf]
    %v127 = vld [vmem:[#allocation2 + $0x30] sm:$0xf]
    %v128 = vld [vmem:[#allocation2 + $0x34] sm:$0xf]
    %v129 = vld [vmem:[#allocation2 + $0x38] sm:$0xf]
    %v130 = vld [vmem:[#allocation2 + $0x3c] sm:$0xf]
    %v131 = vld [vmem:[%s4] sm:$0x1]
    %v133 = vlaneseq
    %v134 = vshrl.u32 %v133, 7
    %v135 = vsub.s32 0, %v134
    %v136 = vrot.slane %v131, %v135
    %v154 = vunpack.c.l.b16 %v115
    %v155 = vunpack.c.l.b16 %v116
    %v156 = vunpack.c.l.b16 %v117
    %v157 = vunpack.c.l.b16 %v118
    %v158 = vunpack.c.l.b16 %v119
    %v159 = vunpack.c.l.b16 %v120
    %v160 = vunpack.c.l.b16 %v121
    %v161 = vunpack.c.l.b16 %v122
    %v162 = vunpack.c.l.b16 %v123
    %v163 = vunpack.c.l.b16 %v124
    %v164 = vunpack.c.l.b16 %v125
    %v165 = vunpack.c.l.b16 %v126
    %v166 = vunpack.c.l.b16 %v127
    %v167 = vunpack.c.l.b16 %v128
    %v168 = vunpack.c.l.b16 %v129
    %v169 = vunpack.c.l.b16 %v130
    %v170 = vpack.c.b16 %v155, %v154
    %v171 = vpack.c.b16 %v157, %v156
    %v172 = vpack.c.b16 %v159, %v158
    %v173 = vpack.c.b16 %v161, %v160
    %v174 = vpack.c.b16 %v163, %v162
    %v175 = vpack.c.b16 %v165, %v164
    %v176 = vpack.c.b16 %v167, %v166
    %v177 = vpack.c.b16 %v169, %v168
    %186 = vmatprep.subr.bf16.mxu0 0
    %187 = vmatpush1.bf16.msra.mxu0 %v177
    %188 = vmatprep.subr.bf16.mxu0 0
    %189 = vmatpush1.bf16.msra.mxu0 %v176
    %190 = vmatprep.subr.bf16.mxu0 0
    %191 = vmatpush1.bf16.msra.mxu0 %v175
    %192 = vmatprep.subr.bf16.mxu0 0
    %193 = vmatpush1.bf16.msra.mxu0 %v174
    %194 = vmatprep.subr.bf16.mxu0 0
    %195 = vmatpush1.bf16.msra.mxu0 %v173
    %196 = vmatprep.subr.bf16.mxu0 0
    %197 = vmatpush1.bf16.msra.mxu0 %v172
    %198 = vmatprep.subr.bf16.mxu0 0
    %199 = vmatpush1.bf16.msra.mxu0 %v171
    %200 = vmatprep.subr.bf16.mxu0 0
    %201 = vmatpush1.bf16.msra.mxu0 %v170
    %202 = vmatprep.subr.bf16.mxu0 0
    %203 = vmatpush2.bf16.msra.mxu0 0
    %204 = vmatprep.subr.bf16.mxu0 0
    %205 = vmatpush2.bf16.msra.mxu0 0
    %206 = vmatprep.subr.bf16.mxu0 0
    %207 = vmatpush2.bf16.msra.mxu0 0
    %208 = vmatprep.subr.bf16.mxu0 0
    %209 = vmatpush2.bf16.msra.mxu0 0
    %210 = vmatprep.subr.bf16.mxu0 0
    %211 = vmatpush2.bf16.msra.mxu0 0
    %212 = vmatprep.subr.bf16.mxu0 0
    %213 = vmatpush2.bf16.msra.mxu0 0
    %214 = vmatprep.subr.bf16.mxu0 0
    %215 = vmatpush2.bf16.msra.mxu0 0
    %216 = vmatprep.subr.bf16.mxu0 0
    %217 = vmatpush2.bf16.msra.mxu0 0
    %218 = vmatprep.mubr.bf16.mxu0 0
    %219 = vmatmul.mubr.bf16.gmra.mxu0 %v114
    %v220 = vpop.f32.mrf.mxu0
    %v221 = vadd.f32 %v136, %v220
    %v222 = vpop.f32.mrf.mxu0
    %v223 = vpop.f32.mrf.mxu0
    %v224 = vpop.f32.mrf.mxu0
    %225 = vdwg.mxu0
    %v226 = vmax.f32 %v221, 0.0
    %v227 = vpack.c.bf16 %v226, %v226
    %v228 = vld [vmem:[#allocation5] sm:$0xf]
    %v229 = vld [vmem:[#allocation5 + $0x4] sm:$0xf]
    %v230 = vld [vmem:[#allocation5 + $0x8] sm:$0xf]
    %v231 = vld [vmem:[#allocation5 + $0xc] sm:$0xf]
    %v232 = vld [vmem:[#allocation5 + $0x10] sm:$0xf]
    %v233 = vld [vmem:[#allocation5 + $0x14] sm:$0xf]
    %v234 = vld [vmem:[#allocation5 + $0x18] sm:$0xf]
    %v235 = vld [vmem:[#allocation5 + $0x1c] sm:$0xf]
    %v236 = vld [vmem:[#allocation5 + $0x20] sm:$0xf]
    %v237 = vld [vmem:[#allocation5 + $0x24] sm:$0xf]
    %v238 = vld [vmem:[#allocation5 + $0x28] sm:$0xf]
    %v239 = vld [vmem:[#allocation5 + $0x2c] sm:$0xf]
    %v240 = vld [vmem:[#allocation5 + $0x30] sm:$0xf]
    %v241 = vld [vmem:[#allocation5 + $0x34] sm:$0xf]
    %v242 = vld [vmem:[#allocation5 + $0x38] sm:$0xf]
    %v243 = vld [vmem:[#allocation5 + $0x3c] sm:$0xf]
    %v244 = vld [vmem:[%s6] sm:$0x1]
    %v246 = vlaneseq
    %v247 = vshrl.u32 %v246, 7
    %v248 = vsub.s32 0, %v247
    %v249 = vrot.slane %v244, %v248
    %v267 = vunpack.c.l.b16 %v228
    %v268 = vunpack.c.l.b16 %v229
    %v269 = vunpack.c.l.b16 %v230
    %v270 = vunpack.c.l.b16 %v231
    %v271 = vunpack.c.l.b16 %v232
    %v272 = vunpack.c.l.b16 %v233
    %v273 = vunpack.c.l.b16 %v234
    %v274 = vunpack.c.l.b16 %v235
    %v275 = vunpack.c.l.b16 %v236
    %v276 = vunpack.c.l.b16 %v237
    %v277 = vunpack.c.l.b16 %v238
    %v278 = vunpack.c.l.b16 %v239
    %v279 = vunpack.c.l.b16 %v240
    %v280 = vunpack.c.l.b16 %v241
    %v281 = vunpack.c.l.b16 %v242
    %v282 = vunpack.c.l.b16 %v243
    %v283 = vpack.c.b16 %v268, %v267
    %v284 = vpack.c.b16 %v270, %v269
    %v285 = vpack.c.b16 %v272, %v271
    %v286 = vpack.c.b16 %v274, %v273
    %v287 = vpack.c.b16 %v276, %v275
    %v288 = vpack.c.b16 %v278, %v277
    %v289 = vpack.c.b16 %v280, %v279
    %v290 = vpack.c.b16 %v282, %v281
    %299 = vmatprep.subr.bf16.mxu0 0
    %300 = vmatpush1.bf16.msra.mxu0 %v290
    %301 = vmatprep.subr.bf16.mxu0 0
    %302 = vmatpush1.bf16.msra.mxu0 %v289
    %303 = vmatprep.subr.bf16.mxu0 0
    %304 = vmatpush1.bf16.msra.mxu0 %v288
    %305 = vmatprep.subr.bf16.mxu0 0
    %306 = vmatpush1.bf16.msra.mxu0 %v287
    %307 = vmatprep.subr.bf16.mxu0 0
    %308 = vmatpush1.bf16.msra.mxu0 %v286
    %309 = vmatprep.subr.bf16.mxu0 0
    %310 = vmatpush1.bf16.msra.mxu0 %v285
    %311 = vmatprep.subr.bf16.mxu0 0
    %312 = vmatpush1.bf16.msra.mxu0 %v284
    %313 = vmatprep.subr.bf16.mxu0 0
    %314 = vmatpush1.bf16.msra.mxu0 %v283
    %315 = vmatprep.subr.bf16.mxu0 0
    %316 = vmatpush2.bf16.msra.mxu0 0
    %317 = vmatprep.subr.bf16.mxu0 0
    %318 = vmatpush2.bf16.msra.mxu0 0
    %319 = vmatprep.subr.bf16.mxu0 0
    %320 = vmatpush2.bf16.msra.mxu0 0
    %321 = vmatprep.subr.bf16.mxu0 0
    %322 = vmatpush2.bf16.msra.mxu0 0
    %323 = vmatprep.subr.bf16.mxu0 0
    %324 = vmatpush2.bf16.msra.mxu0 0
    %325 = vmatprep.subr.bf16.mxu0 0
    %326 = vmatpush2.bf16.msra.mxu0 0
    %327 = vmatprep.subr.bf16.mxu0 0
    %328 = vmatpush2.bf16.msra.mxu0 0
    %329 = vmatprep.subr.bf16.mxu0 0
    %330 = vmatpush2.bf16.msra.mxu0 0
    %331 = vmatprep.mubr.bf16.mxu0 0
    %332 = vmatmul.mubr.bf16.gmra.mxu0 %v227
    %v333 = vpop.f32.mrf.mxu0
    %v334 = vadd.f32 %v249, %v333
    %v335 = vpop.f32.mrf.mxu0
    %v336 = vpop.f32.mrf.mxu0
    %v337 = vpop.f32.mrf.mxu0
    %338 = vdwg.mxu0
    %v339 = vmax.f32 %v334, 0.0
    %340 = vst [vmem:[#allocation7] sm:$0xff] %v339
    // Predicated region
    $region38: #{_qnet_forward_padded.1} parent=1 // pred_check
      _
    $region39: #{_qnet_forward_padded.1} parent=1 // pred_check_branch
      %342 = sbr.rel (0) target = $region41
    $region40: #{_qnet_forward_padded.1} parent=1 // pred_region
      %s344 = ssub.s32 128, 128
      %345 = vsyncadd [#allocation4], %s344
      %s347 = sshll.u32 [#allocation7], 4
      %s348 = int_to_ptr.vmem [resolvable:$true] %s347
      %350 = dma.vmem_to_hbm [thread:$0]  %s348, 128, %s7, [#allocation4]
    $region41: #{_qnet_forward_padded.1} parent=1 // pred_fallthru
      _
    // Predicated region
    $region42: #{_qnet_forward_padded.1} parent=1 // pred_check
      _
    $region43: #{_qnet_forward_padded.1} parent=1 // pred_check_branch
      %352 = sbr.rel (0) target = $region45
    $region44: #{_qnet_forward_padded.1} parent=1 // pred_region
      %353 = dma.done [#allocation4], 128
    $region45: #{_qnet_forward_padded.1} parent=1 // pred_fallthru
      _
    %354 = vsyncpa [#allocation3], 1
    %355 = vsyncpa [#allocation6], 1
    %356 = vsyncpa [#allocation4], 1

</llo_original>
